<compile_context>
chip_gen: v7x
topology: tpu7x:2x2x1
jax: 0.10.0
libtpu: 0.0.40
codegen_flags: <defaults>
</compile_context>

<pallas_src>
import math
import numpy as np

import jax
import jax.numpy as jnp
from jax import lax
from jax.experimental import pallas as pl
from jax.experimental.pallas import tpu as pltpu


# ----------------------------------------------------------------------------
# host-side constants (mirrors DimeNet/GemNet bessel_basis(): zeros + normalizers)
# ----------------------------------------------------------------------------
def _sph_jn(n, x):
    """Spherical Bessel j_n(x), numpy float64, upward recurrence."""
    x = np.asarray(x, dtype=np.float64)
    j0 = np.sin(x) / x
    if n == 0:
        return j0
    j1 = np.sin(x) / x ** 2 - np.cos(x) / x
    if n == 1:
        return j1
    jm1, jc = j0, j1
    for l in range(1, n):
        jn = (2 * l + 1) / x * jc - jm1
        jm1, jc = jc, jn
    return jc


def _bisect(f, lo, hi, iters=100):
    flo = f(lo)
    for _ in range(iters):
        mid = 0.5 * (lo + hi)
        fm = f(mid)
        if (fm < 0) == (flo < 0):
            lo, flo = mid, fm
        else:
            hi = mid
    return 0.5 * (lo + hi)


def _jn_zeros(n, k):
    """First k zeros of spherical Bessel j_l for l = 0..n-1."""
    zeros = np.zeros((n, k))
    zeros[0] = np.arange(1, k + 1) * np.pi
    points = np.arange(1, k + n) * np.pi
    racines = np.zeros(k + n - 1)
    for i in range(1, n):
        for j in range(k + n - 1 - i):
            racines[j] = _bisect(lambda r, i=i: _sph_jn(i, r), points[j], points[j + 1])
        points = racines.copy()
        zeros[i, :k] = racines[:k]
    return zeros


def _basis_constants(S, R, cutoff):
    inv_cutoff = 1.0 / cutoff
    norm_const = inv_cutoff ** 1.5
    zeros = _jn_zeros(S, R)                                   # (S, R), f64
    normalizer = np.zeros((S, R))
    for l in range(S):
        for n in range(R):
            normalizer[l, n] = 1.0 / np.sqrt(0.5 * _sph_jn(l + 1, zeros[l, n]) ** 2)
    z_flat = zeros.reshape(S * R)
    inv_z_flat = 1.0 / z_flat                                 # f64 precision
    norm_flat = normalizer.reshape(S * R) * norm_const
    sph_coef = [math.sqrt((2 * l + 1) / (4.0 * math.pi)) for l in range(S)]
    return z_flat, inv_z_flat, norm_flat, sph_coef


def _round_up(v, m):
    return ((v + m - 1) // m) * m


# ----------------------------------------------------------------------------
# Pallas kernels + wrapper
# ----------------------------------------------------------------------------
def make_spherical_basis_fn(num_spherical, num_radial, cutoff,
                            envelope_exponent=5, max_edge_tile=1024,
                            max_triplet_tile=4096, out_dtype=jnp.float32):
    """Returns a jitted forward(D_ca, Angle_cab, id3_reduce_ca, Kidx) -> (T, S*R)."""
    assert num_radial <= 64
    S, R = num_spherical, num_radial
    SR = S * R
    SR_pad = _round_up(SR, 8)                 # full-sublane-vreg basis axis
    inv_cutoff = 1.0 / cutoff

    # Envelope coefficients (Envelope(exponent): p = exponent + 1)
    p = envelope_exponent + 1
    env_a = -(p + 1) * (p + 2) / 2.0
    env_b = float(p * (p + 2))
    env_c = -p * (p + 1) / 2.0

    z, inv_z, nrm, sph_coef = _basis_constants(S, R, cutoff)
    # Packed constants: col0 = z_{l,n}, col1 = 1/z_{l,n}, col2 = N_{l,n}*norm_const.
    # Padded rows: z=1, 1/z=1, nrm=0 -> exact-zero output rows, no NaN/Inf.
    zc = np.zeros((SR_pad, 3), np.float64)
    zc[:, 0] = 1.0
    zc[:, 1] = 1.0
    zc[:SR, 0] = z
    zc[:SR, 1] = inv_z
    zc[:SR, 2] = nrm
    zc_pack = jnp.asarray(zc.astype(np.float32))              # (SR_pad, 3)

    # vreg budget for stage 1: ~6 live (SR_pad, tile)-wide f32 temps
    # (sinx, cosx, inv_x, j_prev, j_curr, rbf) must fit in <= ~56 of 64 vregs.
    _live = 6
    _lane_tiles = max(1, 56 // ((SR_pad // 8) * _live))
    edge_tile_cap = min(max_edge_tile, _lane_tiles * 128)

    # ---------------- stage 1: per-edge radial * envelope basis --------------
    def radial_kernel(d_ref, zc_ref, out_ref):
        # d_ref  : (1, TE)      edge distances, lane-dense (edges on the 128-lane axis)
        # zc_ref : (SR_pad, 3)  packed [z, 1/z, N*norm_const], row = l*R + n
        # out_ref: (SR_pad, TE) radial*envelope basis, basis index on sublanes
        d_scaled = d_ref[...] * inv_cutoff                    # (1, TE)

        # EUP approx reciprocal + one VPU Newton step — only on the narrow
        # (1, TE) distance row. Full-width 1/x comes from inv_z * inv_d below.
        r = pl.reciprocal(d_scaled, approx=True)
        inv_d = r * (2.0 - d_scaled * r)

        # polynomial cutoff envelope: 1/x + a x^(p-1) + b x^p + c x^(p+1), x<1
        d_pm1 = d_scaled
        for _ in range(p - 2):
            d_pm1 = d_pm1 * d_scaled                          # d_scaled**(p-1)
        env = (inv_d + env_a * d_pm1 + env_b * d_pm1 * d_scaled
               + env_c * d_pm1 * d_scaled * d_scaled)
        u_d = jnp.where(d_scaled < 1.0, env, 0.0)             # (1, TE)

        zc_v = zc_ref[...]
        z_col = zc_v[:, 0:1]                                  # (SR_pad, 1)
        invz_col = zc_v[:, 1:2]
        nrm_col = zc_v[:, 2:3]

        # normalized spherical Bessel j_l(z_{l,n} * d_scaled), per edge
        x = z_col * d_scaled                                  # (SR_pad, TE)
        sinx = jnp.sin(x)                                     # EUP pass 1
        cosx = jnp.cos(x)                                     # EUP pass 2
        inv_x = invz_col * inv_d                              # VPU only (no EUP pass 3)

        # sublane row r = l*R + n has degree l; pick j_l per row via an
        # ascending chain of compares on a NARROW (SR_pad, 1) iota.
        lrow = lax.broadcasted_iota(jnp.int32, (SR_pad, 1), 0)

        j_prev = sinx * inv_x                                 # j_0
        rbf = j_prev
        if S > 1:
            j_curr = (sinx * inv_x - cosx) * inv_x            # j_1
            rbf = jnp.where(lrow >= R, j_curr, rbf)
            for l in range(1, S - 1):
                j_next = (2.0 * l + 1.0) * inv_x * j_curr - j_prev   # j_{l+1}
                rbf = jnp.where(lrow >= (l + 1) * R, j_next, rbf)
                j_prev, j_curr = j_curr, j_next

        out_ref[...] = ((u_d * nrm_col) * rbf).astype(out_ref.dtype)

    # ------------- stage 2: per-triplet Y_l0(theta) * gathered radial --------
    def triplet_kernel(rbf_ref, th_ref, out_ref):
        # rbf_ref: (TT, SR) gathered radial*envelope basis rows for this tile
        # th_ref : (TT, 1)  triplet angles
        # out_ref: (TT, SR) final basis, written directly in out_dtype
        ct = jnp.cos(th_ref[...])                             # (TT, 1)

        vals = [jnp.full_like(ct, sph_coef[0])]               # Y_00 is constant
        if S > 1:
            p_prev = jnp.ones_like(ct)
            p_curr = ct
            vals.append(sph_coef[1] * p_curr)
            for l in range(1, S - 1):
                p_next = ((2.0 * l + 1.0) * ct * p_curr
                          - float(l) * p_prev) * (1.0 / (l + 1))
                vals.append(sph_coef[l + 1] * p_next)
                p_prev, p_curr = p_curr, p_next

        # Expand Y to (TT, SR) with a column-index where-chain (no reshape /
        # concat relayout): column c = l*R + n gets vals[l].
        col = lax.broadcasted_iota(jnp.int32, (1, SR), 1)
        y_exp = vals[0]
        for l in range(1, S):
            y_exp = jnp.where(col >= l * R, vals[l], y_exp)

        out_ref[...] = (rbf_ref[...] * y_exp).astype(out_ref.dtype)

    # ------------------------------- wrapper ---------------------------------
    def forward_impl(D_ca, Angle_cab, id3_reduce_ca, Kidx=None):
        del Kidx                                              # efficient=True only
        E = D_ca.shape[0]
        T = Angle_cab.shape[0]

        # ---- stage 1 tiling (edge axis, lane-dense) ----
        E128 = _round_up(max(E, 1), 128)
        tile_e = min(edge_tile_cap, E128)
        # keep >=2 grid steps when there is enough work so the "parallel" axis
        # can shard across v7x's two TensorCores (negligible cost on v5e/v6e).
        if E128 >= 256 and E128 // tile_e < 2:
            tile_e = _round_up(E128 // 2, 128)
        E_pad = _round_up(max(E, 1), tile_e)

        d_p = jnp.pad(D_ca.astype(jnp.float32), (0, E_pad - E),
                      constant_values=1.0).reshape(1, E_pad)

        rbf_env_t = pl.pallas_call(
            radial_kernel,
            out_shape=jax.ShapeDtypeStruct((SR_pad, E_pad), jnp.float32),
            grid_spec=pltpu.PrefetchScalarGridSpec(
                num_scalar_prefetch=0,
                grid=(E_pad // tile_e,),
                in_specs=[
                    pl.BlockSpec((1, tile_e), lambda i: (0, i)),   # distances
                    pl.BlockSpec((SR_pad, 3), lambda i: (0, 0)),   # constants (resident)
                ],
                out_specs=pl.BlockSpec((SR_pad, tile_e), lambda i: (0, i)),
            ),
            compiler_params=pltpu.CompilerParams(
                dimension_semantics=("parallel",)),
        )(d_p, zc_pack)

        # Small (E_pad, SR) edge table (E << T), gathered per triplet in XLA.
        edge_tab = rbf_env_t[:SR, :].T                        # (E_pad, SR)

        # ---- stage 2 tiling (triplet axis) ----
        T8 = _round_up(max(T, 1), 8)
        n_steps = -(-T8 // max_triplet_tile)                  # ceil
        tile_t = _round_up(-(-T8 // n_steps), 8)
        T_pad = tile_t * n_steps

        id3_p = jnp.pad(id3_reduce_ca.astype(jnp.int32), (0, T_pad - T))
        th_p = jnp.pad(Angle_cab.astype(jnp.float32),
                       (0, T_pad - T)).reshape(T_pad, 1)
        rbf_g = jnp.take(edge_tab, id3_p, axis=0)             # (T_pad, SR)

        out_pad = pl.pallas_call(
            triplet_kernel,
            out_shape=jax.ShapeDtypeStruct((T_pad, SR), out_dtype),
            grid_spec=pltpu.PrefetchScalarGridSpec(
                num_scalar_prefetch=0,
                grid=(n_steps,),
                in_specs=[
                    pl.BlockSpec((tile_t, SR), lambda i: (i, 0)),  # gathered rbf
                    pl.BlockSpec((tile_t, 1), lambda i: (i, 0)),   # angles
                ],
                out_specs=pl.BlockSpec((tile_t, SR), lambda i: (i, 0)),
            ),
            compiler_params=pltpu.CompilerParams(
                dimension_semantics=("parallel",)),
        )(rbf_g, th_p)

        return out_pad[:T]

    return jax.jit(forward_impl)


# ----------------------------------------------------------------------------
# Pure numpy reference (same math, float64) for a sanity check
# ----------------------------------------------------------------------------
def reference_forward(D_ca, Angle_cab, id3_reduce_ca, S, R, cutoff, exponent=5):
    D_ca = np.asarray(D_ca, np.float64)
    theta = np.asarray(Angle_cab, np.float64)
    id3 = np.asarray(id3_reduce_ca)
    inv_cutoff = 1.0 / cutoff
    norm_const = inv_cutoff ** 1.5
    p = exponent + 1
    a = -(p + 1) * (p + 2) / 2.0
    b = float(p * (p + 2))
    c = -p * (p + 1) / 2.0
    zeros = _jn_zeros(S, R)
    normalizer = np.array([[1.0 / np.sqrt(0.5 * _sph_jn(l + 1, zeros[l, n]) ** 2)
                            for n in range(R)] for l in range(S)])
    d_scaled = D_ca * inv_cutoff
    env = (1.0 / d_scaled + a * d_scaled ** (p - 1)
           + b * d_scaled ** p + c * d_scaled ** (p + 1))
    u_d = np.where(d_scaled < 1.0, env, 0.0)
    rbf = np.zeros((D_ca.shape[0], S, R))
    for l in range(S):
        for n in range(R):
            rbf[:, l, n] = norm_const * normalizer[l, n] * _sph_jn(l, zeros[l, n] * d_scaled)
    rbf_env = u_d[:, None, None] * rbf
    ct = np.cos(theta)
    Y = np.zeros((theta.shape[0], S))
    P_prev = np.ones_like(ct)
    Y[:, 0] = math.sqrt(1.0 / (4.0 * math.pi)) * P_prev
    if S > 1:
        P_curr = ct
        Y[:, 1] = math.sqrt(3.0 / (4.0 * math.pi)) * P_curr
        for l in range(1, S - 1):
            P_next = ((2 * l + 1) * ct * P_curr - l * P_prev) / (l + 1)
            Y[:, l + 1] = math.sqrt((2 * (l + 1) + 1) / (4.0 * math.pi)) * P_next
            P_prev, P_curr = P_curr, P_next
    out = rbf_env[id3] * Y[:, :, None]
    return out.reshape(-1, S * R)


if __name__ == "__main__":
    num_spherical, num_radial, cutoff, envelope_exponent = 3, 4, 5.0, 5
    n_edges, n_triplets = 16, 40

    key = jax.random.PRNGKey(0)
    k1, k2, k3, k4 = jax.random.split(key, 4)
    D_ca = jax.random.uniform(k1, (n_edges,), minval=0.5, maxval=cutoff,
                              dtype=jnp.float32)
    Angle_cab = jax.random.uniform(k2, (n_triplets,), minval=0.0, maxval=math.pi,
                                   dtype=jnp.float32)
    id3_reduce_ca = jax.random.randint(k3, (n_triplets,), 0, n_edges)
    Kidx = jax.random.randint(k4, (n_triplets,), 0, 4)   # unused (efficient=False path)

    fwd = make_spherical_basis_fn(num_spherical, num_radial, cutoff,
                                  envelope_exponent)
    out = jax.block_until_ready(fwd(D_ca, Angle_cab, id3_reduce_ca, Kidx))

    assert out.shape == (n_triplets, num_spherical * num_radial)
    ref = reference_forward(np.array(D_ca), np.array(Angle_cab),
                            np.array(id3_reduce_ca), num_spherical, num_radial,
                            cutoff, envelope_exponent)
    np.testing.assert_allclose(np.array(out), ref, rtol=1e-2, atol=1e-3)

    print("KERNEL_OK")
</pallas_src>

<mosaic_0001>
module attributes {stable_mosaic.version = 11 : i64} {
  func.func @radial_kernel(%arg0: i32, %arg1: memref<1x128xf32, #tpu.memory_space<vmem>>, %arg2: memref<16x3xf32, #tpu.memory_space<vmem>>, %arg3: memref<16x128xf32, #tpu.memory_space<vmem>>) attributes {dimension_semantics = [#tpu.dimension_semantics<parallel>], iteration_bounds = array<i64: 1>, scalar_prefetch = 0 : i64, scratch_operands = 0 : i64, tpu.core_type = #tpu.core_type<tc>, window_params = [{transform_indices = @transform_0, window_bounds = array<i64: 1, 128>}, {pipeline_mode = #tpu.pipeline_mode<synchronous>, transform_indices = @transform_1, window_bounds = array<i64: 16, 3>}, {transform_indices = @transform_2, window_bounds = array<i64: 16, 128>}]} {
    %c0 = arith.constant 0 : index
    %c0_0 = arith.constant 0 : index
    %0 = vector.load %arg1[%c0, %c0_0] : memref<1x128xf32, #tpu.memory_space<vmem>>, vector<1x128xf32>
    %cst = arith.constant 2.000000e-01 : f32
    %1 = vector.broadcast %cst : f32 to vector<1x128xf32>
    %2 = arith.mulf %0, %1 : vector<1x128xf32>
    %3 = tpu.reciprocal %2 {approx = true} : vector<1x128xf32> -> vector<1x128xf32>
    %4 = arith.mulf %2, %3 : vector<1x128xf32>
    %cst_1 = arith.constant 2.000000e+00 : f32
    %5 = vector.broadcast %cst_1 : f32 to vector<1x128xf32>
    %6 = arith.subf %5, %4 : vector<1x128xf32>
    %7 = arith.mulf %3, %6 : vector<1x128xf32>
    %8 = arith.mulf %2, %2 : vector<1x128xf32>
    %9 = arith.mulf %8, %2 : vector<1x128xf32>
    %10 = arith.mulf %9, %2 : vector<1x128xf32>
    %11 = arith.mulf %10, %2 : vector<1x128xf32>
    %cst_2 = arith.constant -2.800000e+01 : f32
    %12 = vector.broadcast %cst_2 : f32 to vector<1x128xf32>
    %13 = arith.mulf %12, %11 : vector<1x128xf32>
    %14 = arith.addf %7, %13 : vector<1x128xf32>
    %cst_3 = arith.constant 4.800000e+01 : f32
    %15 = vector.broadcast %cst_3 : f32 to vector<1x128xf32>
    %16 = arith.mulf %15, %11 : vector<1x128xf32>
    %17 = arith.mulf %16, %2 : vector<1x128xf32>
    %18 = arith.addf %14, %17 : vector<1x128xf32>
    %cst_4 = arith.constant -2.100000e+01 : f32
    %19 = vector.broadcast %cst_4 : f32 to vector<1x128xf32>
    %20 = arith.mulf %19, %11 : vector<1x128xf32>
    %21 = arith.mulf %20, %2 : vector<1x128xf32>
    %22 = arith.mulf %21, %2 : vector<1x128xf32>
    %23 = arith.addf %18, %22 : vector<1x128xf32>
    %cst_5 = arith.constant 1.000000e+00 : f32
    %24 = vector.broadcast %cst_5 : f32 to vector<1x128xf32>
    %25 = arith.cmpf olt, %2, %24 : vector<1x128xf32>
    %cst_6 = arith.constant 0.000000e+00 : f32
    %26 = vector.broadcast %cst_6 : f32 to vector<1x128xf32>
    %27 = arith.select %25, %23, %26 : vector<1x128xi1>, vector<1x128xf32>
    %c0_7 = arith.constant 0 : index
    %c0_8 = arith.constant 0 : index
    %28 = vector.load %arg2[%c0_7, %c0_8] : memref<16x3xf32, #tpu.memory_space<vmem>>, vector<16x3xf32>
    %29 = vector.extract_strided_slice %28 {offsets = [0, 0], sizes = [16, 1], strides = [1, 1]} : vector<16x3xf32> to vector<16x1xf32>
    %30 = vector.extract_strided_slice %28 {offsets = [0, 1], sizes = [16, 1], strides = [1, 1]} : vector<16x3xf32> to vector<16x1xf32>
    %31 = vector.extract_strided_slice %28 {offsets = [0, 2], sizes = [16, 1], strides = [1, 1]} : vector<16x3xf32> to vector<16x1xf32>
    %32 = vector.broadcast %29 : vector<16x1xf32> to vector<16x128xf32>
    %33 = vector.broadcast %2 : vector<1x128xf32> to vector<16x128xf32>
    %34 = arith.mulf %32, %33 : vector<16x128xf32>
    %35 = math.sin %34 : vector<16x128xf32>
    %36 = math.cos %34 : vector<16x128xf32>
    %37 = vector.broadcast %30 : vector<16x1xf32> to vector<16x128xf32>
    %38 = vector.broadcast %7 : vector<1x128xf32> to vector<16x128xf32>
    %39 = arith.mulf %37, %38 : vector<16x128xf32>
    %40 = tpu.iota {dimensions = array<i32: 0>} : vector<16x1xi32>
    %41 = arith.mulf %35, %39 : vector<16x128xf32>
    %42 = arith.mulf %35, %39 : vector<16x128xf32>
    %43 = arith.subf %42, %36 : vector<16x128xf32>
    %44 = arith.mulf %43, %39 : vector<16x128xf32>
    %c4_i32 = arith.constant 4 : i32
    %45 = vector.broadcast %c4_i32 : i32 to vector<16x1xi32>
    %46 = arith.cmpi sge, %40, %45 : vector<16x1xi32>
    %47 = vector.shape_cast %46 : vector<16x1xi1> to vector<16x1xi1>
    %48 = vector.broadcast %47 : vector<16x1xi1> to vector<16x128xi1>
    %49 = arith.select %48, %44, %41 : vector<16x128xi1>, vector<16x128xf32>
    %cst_9 = arith.constant 3.000000e+00 : f32
    %50 = vector.broadcast %cst_9 : f32 to vector<16x128xf32>
    %51 = arith.mulf %50, %39 : vector<16x128xf32>
    %52 = arith.mulf %51, %44 : vector<16x128xf32>
    %53 = arith.subf %52, %41 : vector<16x128xf32>
    %c8_i32 = arith.constant 8 : i32
    %54 = vector.broadcast %c8_i32 : i32 to vector<16x1xi32>
    %55 = arith.cmpi sge, %40, %54 : vector<16x1xi32>
    %56 = vector.shape_cast %55 : vector<16x1xi1> to vector<16x1xi1>
    %57 = vector.broadcast %56 : vector<16x1xi1> to vector<16x128xi1>
    %58 = arith.select %57, %53, %49 : vector<16x128xi1>, vector<16x128xf32>
    %59 = vector.broadcast %27 : vector<1x128xf32> to vector<16x128xf32>
    %60 = vector.broadcast %31 : vector<16x1xf32> to vector<16x128xf32>
    %61 = arith.mulf %59, %60 : vector<16x128xf32>
    %62 = arith.mulf %61, %58 : vector<16x128xf32>
    %c0_10 = arith.constant 0 : index
    %c0_11 = arith.constant 0 : index
    %63 = vector.load %arg3[%c0_10, %c0_11] : memref<16x128xf32, #tpu.memory_space<vmem>>, vector<16x128xf32>
    tpu.vector_store %arg3[%c0_10, %c0_11], %62 {strides = array<i32>} : memref<16x128xf32, #tpu.memory_space<vmem>>, vector<16x128xf32>,
    return
  }
  func.func @transform_0(%arg0: i32) -> (i32, i32) {
    %c0_i32 = arith.constant 0 : i32
    %c0_i32_0 = arith.constant 0 : i32
    return %c0_i32, %arg0 : i32, i32
  }
  func.func @transform_1(%arg0: i32) -> (i32, i32) {
    %c0_i32 = arith.constant 0 : i32
    %c0_i32_0 = arith.constant 0 : i32
    %c0_i32_1 = arith.constant 0 : i32
    return %c0_i32, %c0_i32_0 : i32, i32
  }
  func.func @transform_2(%arg0: i32) -> (i32, i32) {
    %c0_i32 = arith.constant 0 : i32
    %c0_i32_0 = arith.constant 0 : i32
    return %c0_i32, %arg0 : i32, i32
  }
}

module attributes {stable_mosaic.version = 11 : i64} {
  func.func @triplet_kernel(%arg0: i32, %arg1: memref<40x12xf32, #tpu.memory_space<vmem>>, %arg2: memref<40x1xf32, #tpu.memory_space<vmem>>, %arg3: memref<40x12xf32, #tpu.memory_space<vmem>>) attributes {dimension_semantics = [#tpu.dimension_semantics<parallel>], iteration_bounds = array<i64: 1>, scalar_prefetch = 0 : i64, scratch_operands = 0 : i64, tpu.core_type = #tpu.core_type<tc>, window_params = [{transform_indices = @transform_0, window_bounds = array<i64: 40, 12>}, {transform_indices = @transform_1, window_bounds = array<i64: 40, 1>}, {transform_indices = @transform_2, window_bounds = array<i64: 40, 12>}]} {
    %c0 = arith.constant 0 : index
    %c0_0 = arith.constant 0 : index
    %0 = vector.load %arg2[%c0, %c0_0] : memref<40x1xf32, #tpu.memory_space<vmem>>, vector<40x1xf32>
    %1 = math.cos %0 : vector<40x1xf32>
    %cst = arith.constant 0.282094806 : f32
    %2 = vector.broadcast %cst : f32 to vector<40x1xf32>
    %cst_1 = arith.constant 1.000000e+00 : f32
    %3 = vector.broadcast %cst_1 : f32 to vector<40x1xf32>
    %cst_2 = arith.constant 0.488602519 : f32
    %4 = vector.broadcast %cst_2 : f32 to vector<40x1xf32>
    %5 = arith.mulf %4, %1 : vector<40x1xf32>
    %cst_3 = arith.constant 3.000000e+00 : f32
    %6 = vector.broadcast %cst_3 : f32 to vector<40x1xf32>
    %7 = arith.mulf %6, %1 : vector<40x1xf32>
    %8 = arith.mulf %7, %1 : vector<40x1xf32>
    %cst_4 = arith.constant 1.000000e+00 : f32
    %9 = vector.broadcast %cst_4 : f32 to vector<40x1xf32>
    %10 = arith.mulf %9, %3 : vector<40x1xf32>
    %11 = arith.subf %8, %10 : vector<40x1xf32>
    %cst_5 = arith.constant 5.000000e-01 : f32
    %12 = vector.broadcast %cst_5 : f32 to vector<40x1xf32>
    %13 = arith.mulf %11, %12 : vector<40x1xf32>
    %cst_6 = arith.constant 0.63078314 : f32
    %14 = vector.broadcast %cst_6 : f32 to vector<40x1xf32>
    %15 = arith.mulf %14, %13 : vector<40x1xf32>
    %16 = tpu.iota {dimensions = array<i32: 1>} : vector<1x12xi32>
    %c4_i32 = arith.constant 4 : i32
    %17 = vector.broadcast %c4_i32 : i32 to vector<1x12xi32>
    %18 = arith.cmpi sge, %16, %17 : vector<1x12xi32>
    %19 = vector.shape_cast %18 : vector<1x12xi1> to vector<1x12xi1>
    %20 = vector.broadcast %19 : vector<1x12xi1> to vector<40x12xi1>
    %21 = vector.shape_cast %5 : vector<40x1xf32> to vector<40x1xf32>
    %22 = vector.broadcast %21 : vector<40x1xf32> to vector<40x12xf32>
    %23 = vector.shape_cast %2 : vector<40x1xf32> to vector<40x1xf32>
    %24 = vector.broadcast %23 : vector<40x1xf32> to vector<40x12xf32>
    %25 = arith.select %20, %22, %24 : vector<40x12xi1>, vector<40x12xf32>
    %c8_i32 = arith.constant 8 : i32
    %26 = vector.broadcast %c8_i32 : i32 to vector<1x12xi32>
    %27 = arith.cmpi sge, %16, %26 : vector<1x12xi32>
    %28 = vector.shape_cast %27 : vector<1x12xi1> to vector<1x12xi1>
    %29 = vector.broadcast %28 : vector<1x12xi1> to vector<40x12xi1>
    %30 = vector.shape_cast %15 : vector<40x1xf32> to vector<40x1xf32>
    %31 = vector.broadcast %30 : vector<40x1xf32> to vector<40x12xf32>
    %32 = arith.select %29, %31, %25 : vector<40x12xi1>, vector<40x12xf32>
    %c0_7 = arith.constant 0 : index
    %c0_8 = arith.constant 0 : index
    %33 = vector.load %arg1[%c0_7, %c0_8] : memref<40x12xf32, #tpu.memory_space<vmem>>, vector<40x12xf32>
    %34 = arith.mulf %33, %32 : vector<40x12xf32>
    %c0_9 = arith.constant 0 : index
    %c0_10 = arith.constant 0 : index
    %35 = vector.load %arg3[%c0_9, %c0_10] : memref<40x12xf32, #tpu.memory_space<vmem>>, vector<40x12xf32>
    tpu.vector_store %arg3[%c0_9, %c0_10], %34 {strides = array<i32>} : memref<40x12xf32, #tpu.memory_space<vmem>>, vector<40x12xf32>,
    return
  }
  func.func @transform_0(%arg0: i32) -> (i32, i32) {
    %c0_i32 = arith.constant 0 : i32
    %c0_i32_0 = arith.constant 0 : i32
    return %arg0, %c0_i32 : i32, i32
  }
  func.func @transform_1(%arg0: i32) -> (i32, i32) {
    %c0_i32 = arith.constant 0 : i32
    %c0_i32_0 = arith.constant 0 : i32
    return %arg0, %c0_i32 : i32, i32
  }
  func.func @transform_2(%arg0: i32) -> (i32, i32) {
    %c0_i32 = arith.constant 0 : i32
    %c0_i32_0 = arith.constant 0 : i32
    return %arg0, %c0_i32 : i32, i32
  }
}

</mosaic_0001>

<llo_original>
// kernel: forward_impl.2
$region0: #{forward_impl.2}
  #allocation0 [shape = 'u32[]', space=smem, size = 0x4, offset = 0x4, fixed_abs, tag = 'smem constant byte address 0x4 - core index']
  #allocation1 [shape = 'u32[144,128]{1,0:T(1,128)}', space=vmem, size = 0x12000, scoped, tag = 'internal scratch']
  %s0 = inlined_call_operand.vmem [shape: f32[1,128], index: 0, kind: input, shape index: {}]
  %s1 = inlined_call_operand.hbm [shape: f32[16,3], index: 1, kind: input, shape index: {}]
  %s2 = inlined_call_operand.vmem [shape: f32[16,128], index: 2, kind: output, shape index: {}]
  %s3 = sld [smem:[#allocation0]]
  $region22: #{forward_impl.2} parent=0
    _
  %s5 = ssub.s32 1, %s3
  %s6 = scalar_select 0, %s5, %s3
  $region1: #{forward_impl.2} parent=0
    #allocation2 [shape = 'u8[8192]{0}', space=vmem, size = 0x2000, scoped, tag = 'input window, operand 1, single buffered']
    #allocation3 [shape = 's32[1]{0}', space=sflag, size = 0x4, scoped, tag = 'scoped memory for forward_impl.2']
    %7 = vsyncpa [#allocation3], 0
    // Predicated region
    $region2: #{forward_impl.2} parent=1 // pred_check
      _
    $region3: #{forward_impl.2} parent=1 // pred_check_branch
      %9 = sbr.rel (0) target = $region5
    $region4: #{forward_impl.2} parent=1 // pred_region
      _
    $region5: #{forward_impl.2} parent=1 // pred_fallthru
      _
    // Predicated region
    $region6: #{forward_impl.2} parent=1 // pred_check
      _
    $region7: #{forward_impl.2} parent=1 // pred_check_branch
      %11 = sbr.rel (0) target = $region9
    $region8: #{forward_impl.2} parent=1 // pred_region
      %s13 = ssub.s32 256, 256
      %14 = vsyncadd [#allocation3], %s13
      %s15 = sshll.u32 [#allocation2], 4
      %s16 = int_to_ptr.vmem [resolvable:$true] %s15
      %21 = dma.hbm_to_vmem [thread:$0]  %s1, 256, %s16, [#allocation3], 128, 128, 8
    $region9: #{forward_impl.2} parent=1 // pred_fallthru
      _
    // Predicated region
    $region10: #{forward_impl.2} parent=1 // pred_check
      _
    $region11: #{forward_impl.2} parent=1 // pred_check_branch
      %23 = sbr.rel (0) target = $region13
    $region12: #{forward_impl.2} parent=1 // pred_region
      %24 = dma.done [#allocation3], 256
    $region13: #{forward_impl.2} parent=1 // pred_fallthru
      _
    %v25 = vld [vmem:[%s0] sm:$0x1]
    %v26 = vmul.f32 %v25, 0.2
    %v27 = vrcp.pop %v26
    %v28 = vmul.f32 %v26, %v27
    %v29 = vsub.f32 2.0, %v28
    %v30 = vmul.f32 %v27, %v29
    %v31 = vmul.f32 %v26, %v26
    %v32 = vmul.f32 %v31, %v26
    %v33 = vmul.f32 %v32, %v26
    %v34 = vmul.f32 %v33, %v26
    %v35 = vmul.f32 %v34, -28.0
    %v36 = vadd.f32 %v30, %v35
    %v37 = vmul.f32 %v34, 48.0
    %v38 = vmul.f32 %v37, %v26
    %v39 = vadd.f32 %v36, %v38
    %v40 = vmul.f32 %v34, -21.0
    %v41 = vmul.f32 %v40, %v26
    %v42 = vmul.f32 %v41, %v26
    %v43 = vadd.f32 %v39, %v42
    %vm44 = vcmp.lt.f32.partialorder %v26, 1.0
    %v45 = vsel %vm44, %v43, 0.0
    %v46 = vld [vmem:[#allocation2] sm:$0xff]
    %v47 = vld [vmem:[#allocation2 + $0x8] sm:$0xff]
    %49 = vset.pattern.permute.xlu0 0
    %50 = vperm.xlu0 %49, %v46
    %v51 = vpop.permute.xlu0 %50
    %54 = vset.pattern.permute.xlu0 0
    %55 = vperm.xlu0 %54, %v47
    %v56 = vpop.permute.xlu0 %55
    %v59 = vlaneseq
    %v60 = vshrl.u32 %v59, 7
    %v61 = vsub.s32 0, %v60
    %v62 = vrot.slane %v26, %v61
    %v64 = vmul.f32 %v51, %v62
    %v65 = vmul.f32 %v56, %v62
    %v66 = vand.u32 2147483647, %v64
    %vm67 = vcmp.le.f32.partialorder %v66, 0.7853982
    %vm68 = vcmp.lt.s32.totalorder %v64, 0
    %v69 = vand.u32 %v64, 2139095040
    %v70 = vshrl.u32 %v69, 23
    %v71 = vsub.s32 %v70, 127
    %v72 = vand.u32 2147483647, %v64
    %v73 = vand.u32 %v72, 8388607
    %v74 = vor.u32 %v73, 8388608
    %v75 = vsub.s32 0, %v74
    %v76 = vadd.s32 %v71, 1
    %vm77 = vcmp.gt.s32.totalorder %v76, 0
    %v78 = vsel %vm77, %v76, 0
    %v79 = vshrl.u32 %v78, 5
    %v80 = vand.u32 %v78, 31
    %v81 = vsub.s32 32, %v80
    %v82 = vshrl.u32 683565275, %v81
    %v83 = vshll.u32 683565275, %v80
    %v84 = vshrl.u32 2475754826, %v81
    %v85 = vor.u32 %v83, %v84
    %v86 = vshll.u32 2475754826, %v80
    %v87 = vshrl.u32 2131351028, %v81
    %v88 = vor.u32 %v86, %v87
    %v89 = vshll.u32 2131351028, %v80
    %v90 = vshrl.u32 2102212464, %v81
    %v91 = vor.u32 %v89, %v90
    %v92 = vshll.u32 2102212464, %v80
    %v93 = vshrl.u32 920167782, %v81
    %v94 = vor.u32 %v92, %v93
    %v95 = vshll.u32 920167782, %v80
    %v96 = vshrl.u32 1326507024, %v81
    %v97 = vor.u32 %v95, %v96
    %vm98 = vcmp.lt.s32.totalorder %v79, 1
    %vm99 = vcmp.lt.s32.totalorder %v79, 2
    %vm100 = vcmp.lt.s32.totalorder %v79, 3
    %vm101 = vcmp.lt.s32.totalorder %v79, 4
    %v102 = vsel %vm98, %v82, %v85
    %v103 = vsel %vm101, %v91, 2102212464
    %v104 = vsel %vm100, %v88, %v103
    %v105 = vsel %vm99, %v102, %v104
    %v106 = vsel %vm98, %v85, %v88
    %v107 = vsel %vm101, %v94, 920167782
    %v108 = vsel %vm100, %v91, %v107
    %v109 = vsel %vm99, %v106, %v108
    %v110 = vsel %vm98, %v88, %v91
    %v111 = vsel %vm101, %v97, 1326507024
    %v112 = vsel %vm100, %v94, %v111
    %v113 = vsel %vm99, %v110, %v112
    %v114 = vshll.u32 %v74, 8
    %v115 = vmul.u32.u64.compose %v114, %v113
    %v116 = vextract.low.u32 %v115
    %v117 = vextract.high.u32 %v115
    %v118 = vmul.u32.u64.compose %v114, %v109
    %v119 = vextract.low.u32 %v118
    %v120 = vextract.high.u32 %v118
    %v121 = vmul.u32 %v114, %v105
    %v122 = vadd.s32 %v117, %v119
    %vm123 = vc.u32 %v117, %v119
    %v124 = vadd.s32 %v120, 1
    %v125 = vsel %vm123, %v124, %v120
    %v126 = vadd.s32 %v121, %v125
    %v127 = vadd.s32 %v126, 536870912
    %v128 = vshrl.u32 %v127, 30
    %v129 = vshll.u32 %v128, 30
    %v130 = vsub.s32 %v126, %v129
    %vm131 = vcmp.lt.s32.totalorder %v130, 0
    %v132 = vsub.s32 0, %v130
    %v133 = vsel %vm131, %v132, %v130
    %v134 = vclz %v133
    %v135 = vsub.s32 %v134, 2
    %vm136 = vcmp.gt.s32.totalorder 0, %v135
    %v137 = vsel %vm136, 0, %v135
    %v138 = vsub.s32 32, %v137
    %v139 = vshll.u32 %v130, %v137
    %v140 = vshrl.u32 %v122, %v138
    %v141 = vor.u32 %v139, %v140
    %v142 = vsub.s32 4294967266, %v137
    %v143 = vadd.s32 %v142, 127
    %v144 = vshll.u32 %v143, 23
    %v145 = vor.u32 4788187, %v144
    %v146 = vand.u32 2147483647, %v145
    %v148 = vcvt.s32.f32 %v141
    %v149 = vmul.f32 %v148, %v146
    %v150 = vxor.u32 %v149, 2147483648
    %v151 = vsel %vm68, %v150, %v149
    %v152 = vsub.s32 4, %v128
    %v153 = vsel %vm68, %v152, %v128
    %v154 = vsel %vm67, %v64, %v151
    %v155 = vsel %vm67, 0, %v153
    %v156 = vcosq.f32.pop %v154
    %v157 = vsinq.f32.pop %v154
    %vm158 = vweird.f32 %v64
    %v159 = vadd.s32 %v155, 3
    %v160 = vand.u32 %v159, 3
    %vm161 = vcmp.lt.s32.totalorder %v160, 2
    %vm162 = vcmp.eq.s32.totalorder %v160, 0
    %v163 = vxor.u32 %v157, 2147483648
    %v164 = vsel %vm162, %v156, %v163
    %vm165 = vcmp.eq.s32.totalorder %v160, 2
    %v166 = vxor.u32 %v156, 2147483648
    %v167 = vsel %vm165, %v166, %v157
    %v168 = vsel %vm161, %v164, %v167
    %v169 = vsel %vm158, nan, %v168
    %v170 = vand.u32 2147483647, %v65
    %vm171 = vcmp.le.f32.partialorder %v170, 0.7853982
    %vm172 = vcmp.lt.s32.totalorder %v65, 0
    %v173 = vand.u32 %v65, 2139095040
    %v174 = vshrl.u32 %v173, 23
    %v175 = vsub.s32 %v174, 127
    %v176 = vand.u32 2147483647, %v65
    %v177 = vand.u32 %v176, 8388607
    %v178 = vor.u32 %v177, 8388608
    %v179 = vsub.s32 0, %v178
    %v180 = vadd.s32 %v175, 1
    %vm181 = vcmp.gt.s32.totalorder %v180, 0
    %v182 = vsel %vm181, %v180, 0
    %v183 = vshrl.u32 %v182, 5
    %v184 = vand.u32 %v182, 31
    %v185 = vsub.s32 32, %v184
    %v186 = vshrl.u32 683565275, %v185
    %v187 = vshll.u32 683565275, %v184
    %v188 = vshrl.u32 2475754826, %v185
    %v189 = vor.u32 %v187, %v188
    %v190 = vshll.u32 2475754826, %v184
    %v191 = vshrl.u32 2131351028, %v185
    %v192 = vor.u32 %v190, %v191
    %v193 = vshll.u32 2131351028, %v184
    %v194 = vshrl.u32 2102212464, %v185
    %v195 = vor.u32 %v193, %v194
    %v196 = vshll.u32 2102212464, %v184
    %v197 = vshrl.u32 920167782, %v185
    %v198 = vor.u32 %v196, %v197
    %v199 = vshll.u32 920167782, %v184
    %v200 = vshrl.u32 1326507024, %v185
    %v201 = vor.u32 %v199, %v200
    %vm202 = vcmp.lt.s32.totalorder %v183, 1
    %vm203 = vcmp.lt.s32.totalorder %v183, 2
    %vm204 = vcmp.lt.s32.totalorder %v183, 3
    %vm205 = vcmp.lt.s32.totalorder %v183, 4
    %v206 = vsel %vm202, %v186, %v189
    %v207 = vsel %vm205, %v195, 2102212464
    %v208 = vsel %vm204, %v192, %v207
    %v209 = vsel %vm203, %v206, %v208
    %v210 = vsel %vm202, %v189, %v192
    %v211 = vsel %vm205, %v198, 920167782
    %v212 = vsel %vm204, %v195, %v211
    %v213 = vsel %vm203, %v210, %v212
    %v214 = vsel %vm202, %v192, %v195
    %v215 = vsel %vm205, %v201, 1326507024
    %v216 = vsel %vm204, %v198, %v215
    %v217 = vsel %vm203, %v214, %v216
    %v218 = vshll.u32 %v178, 8
    %v219 = vmul.u32.u64.compose %v218, %v217
    %v220 = vextract.low.u32 %v219
    %v221 = vextract.high.u32 %v219
    %v222 = vmul.u32.u64.compose %v218, %v213
    %v223 = vextract.low.u32 %v222
    %v224 = vextract.high.u32 %v222
    %v225 = vmul.u32 %v218, %v209
    %v226 = vadd.s32 %v221, %v223
    %vm227 = vc.u32 %v221, %v223
    %v228 = vadd.s32 %v224, 1
    %v229 = vsel %vm227, %v228, %v224
    %v230 = vadd.s32 %v225, %v229
    %v231 = vadd.s32 %v230, 536870912
    %v232 = vshrl.u32 %v231, 30
    %v233 = vshll.u32 %v232, 30
    %v234 = vsub.s32 %v230, %v233
    %vm235 = vcmp.lt.s32.totalorder %v234, 0
    %v236 = vsub.s32 0, %v234
    %v237 = vsel %vm235, %v236, %v234
    %v238 = vclz %v237
    %v239 = vsub.s32 %v238, 2
    %vm240 = vcmp.gt.s32.totalorder 0, %v239
    %v241 = vsel %vm240, 0, %v239
    %v242 = vsub.s32 32, %v241
    %v243 = vshll.u32 %v234, %v241
    %v244 = vshrl.u32 %v226, %v242
    %v245 = vor.u32 %v243, %v244
    %v246 = vsub.s32 4294967266, %v241
    %v247 = vadd.s32 %v246, 127
    %v248 = vshll.u32 %v247, 23
    %v249 = vor.u32 4788187, %v248
    %v250 = vand.u32 2147483647, %v249
    %v252 = vcvt.s32.f32 %v245
    %v253 = vmul.f32 %v252, %v250
    %v254 = vxor.u32 %v253, 2147483648
    %v255 = vsel %vm172, %v254, %v253
    %v256 = vsub.s32 4, %v232
    %v257 = vsel %vm172, %v256, %v232
    %v258 = vsel %vm171, %v65, %v255
    %v259 = vsel %vm171, 0, %v257
    %v260 = vcosq.f32.pop %v258
    %v261 = vsinq.f32.pop %v258
    %vm262 = vweird.f32 %v65
    %v263 = vadd.s32 %v259, 3
    %v264 = vand.u32 %v263, 3
    %vm265 = vcmp.lt.s32.totalorder %v264, 2
    %vm266 = vcmp.eq.s32.totalorder %v264, 0
    %v267 = vxor.u32 %v261, 2147483648
    %v268 = vsel %vm266, %v260, %v267
    %vm269 = vcmp.eq.s32.totalorder %v264, 2
    %v270 = vxor.u32 %v260, 2147483648
    %v271 = vsel %vm269, %v270, %v261
    %v272 = vsel %vm265, %v268, %v271
    %v273 = vsel %vm262, nan, %v272
    %v274 = vand.u32 2147483647, %v64
    %vm275 = vcmp.le.f32.partialorder %v274, 0.7853982
    %vm276 = vcmp.lt.s32.totalorder %v64, 0
    %v277 = vand.u32 %v64, 2139095040
    %v278 = vshrl.u32 %v277, 23
    %v279 = vsub.s32 %v278, 127
    %v280 = vand.u32 2147483647, %v64
    %v281 = vand.u32 %v280, 8388607
    %v282 = vor.u32 %v281, 8388608
    %v283 = vsub.s32 0, %v282
    %v284 = vadd.s32 %v279, 1
    %vm285 = vcmp.gt.s32.totalorder %v284, 0
    %v286 = vsel %vm285, %v284, 0
    %v287 = vshrl.u32 %v286, 5
    %v288 = vand.u32 %v286, 31
    %v289 = vsub.s32 32, %v288
    %v290 = vshrl.u32 683565275, %v289
    %v291 = vshll.u32 683565275, %v288
    %v292 = vshrl.u32 2475754826, %v289
    %v293 = vor.u32 %v291, %v292
    %v294 = vshll.u32 2475754826, %v288
    %v295 = vshrl.u32 2131351028, %v289
    %v296 = vor.u32 %v294, %v295
    %v297 = vshll.u32 2131351028, %v288
    %v298 = vshrl.u32 2102212464, %v289
    %v299 = vor.u32 %v297, %v298
    %v300 = vshll.u32 2102212464, %v288
    %v301 = vshrl.u32 920167782, %v289
    %v302 = vor.u32 %v300, %v301
    %v303 = vshll.u32 920167782, %v288
    %v304 = vshrl.u32 1326507024, %v289
    %v305 = vor.u32 %v303, %v304
    %vm306 = vcmp.lt.s32.totalorder %v287, 1
    %vm307 = vcmp.lt.s32.totalorder %v287, 2
    %vm308 = vcmp.lt.s32.totalorder %v287, 3
    %vm309 = vcmp.lt.s32.totalorder %v287, 4
    %v310 = vsel %vm306, %v290, %v293
    %v311 = vsel %vm309, %v299, 2102212464
    %v312 = vsel %vm308, %v296, %v311
    %v313 = vsel %vm307, %v310, %v312
    %v314 = vsel %vm306, %v293, %v296
    %v315 = vsel %vm309, %v302, 920167782
    %v316 = vsel %vm308, %v299, %v315
    %v317 = vsel %vm307, %v314, %v316
    %v318 = vsel %vm306, %v296, %v299
    %v319 = vsel %vm309, %v305, 1326507024
    %v320 = vsel %vm308, %v302, %v319
    %v321 = vsel %vm307, %v318, %v320
    %v322 = vshll.u32 %v282, 8
    %v323 = vmul.u32.u64.compose %v322, %v321
    %v324 = vextract.low.u32 %v323
    %v325 = vextract.high.u32 %v323
    %v326 = vmul.u32.u64.compose %v322, %v317
    %v327 = vextract.low.u32 %v326
    %v328 = vextract.high.u32 %v326
    %v329 = vmul.u32 %v322, %v313
    %v330 = vadd.s32 %v325, %v327
    %vm331 = vc.u32 %v325, %v327
    %v332 = vadd.s32 %v328, 1
    %v333 = vsel %vm331, %v332, %v328
    %v334 = vadd.s32 %v329, %v333
    %v335 = vadd.s32 %v334, 536870912
    %v336 = vshrl.u32 %v335, 30
    %v337 = vshll.u32 %v336, 30
    %v338 = vsub.s32 %v334, %v337
    %vm339 = vcmp.lt.s32.totalorder %v338, 0
    %v340 = vsub.s32 0, %v338
    %v341 = vsel %vm339, %v340, %v338
    %v342 = vclz %v341
    %v343 = vsub.s32 %v342, 2
    %vm344 = vcmp.gt.s32.totalorder 0, %v343
    %v345 = vsel %vm344, 0, %v343
    %v346 = vsub.s32 32, %v345
    %v347 = vshll.u32 %v338, %v345
    %v348 = vshrl.u32 %v330, %v346
    %v349 = vor.u32 %v347, %v348
    %v350 = vsub.s32 4294967266, %v345
    %v351 = vadd.s32 %v350, 127
    %v352 = vshll.u32 %v351, 23
    %v353 = vor.u32 4788187, %v352
    %v354 = vand.u32 2147483647, %v353
    %v356 = vcvt.s32.f32 %v349
    %v357 = vmul.f32 %v356, %v354
    %v358 = vxor.u32 %v357, 2147483648
    %v359 = vsel %vm276, %v358, %v357
    %v360 = vsub.s32 4, %v336
    %v361 = vsel %vm276, %v360, %v336
    %v362 = vsel %vm275, %v64, %v359
    %v363 = vsel %vm275, 0, %v361
    %v364 = vcosq.f32.pop %v362
    %v365 = vsinq.f32.pop %v362
    %vm366 = vweird.f32 %v64
    %v367 = vand.u32 %v363, 3
    %vm368 = vcmp.lt.s32.totalorder %v367, 2
    %vm369 = vcmp.eq.s32.totalorder %v367, 0
    %v370 = vxor.u32 %v365, 2147483648
    %v371 = vsel %vm369, %v364, %v370
    %vm372 = vcmp.eq.s32.totalorder %v367, 2
    %v373 = vxor.u32 %v364, 2147483648
    %v374 = vsel %vm372, %v373, %v365
    %v375 = vsel %vm368, %v371, %v374
    %v376 = vsel %vm366, nan, %v375
    %v377 = vand.u32 2147483647, %v65
    %vm378 = vcmp.le.f32.partialorder %v377, 0.7853982
    %vm379 = vcmp.lt.s32.totalorder %v65, 0
    %v380 = vand.u32 %v65, 2139095040
    %v381 = vshrl.u32 %v380, 23
    %v382 = vsub.s32 %v381, 127
    %v383 = vand.u32 2147483647, %v65
    %v384 = vand.u32 %v383, 8388607
    %v385 = vor.u32 %v384, 8388608
    %v386 = vsub.s32 0, %v385
    %v387 = vadd.s32 %v382, 1
    %vm388 = vcmp.gt.s32.totalorder %v387, 0
    %v389 = vsel %vm388, %v387, 0
    %v390 = vshrl.u32 %v389, 5
    %v391 = vand.u32 %v389, 31
    %v392 = vsub.s32 32, %v391
    %v393 = vshrl.u32 683565275, %v392
    %v394 = vshll.u32 683565275, %v391
    %v395 = vshrl.u32 2475754826, %v392
    %v396 = vor.u32 %v394, %v395
    %v397 = vshll.u32 2475754826, %v391
    %v398 = vshrl.u32 2131351028, %v392
    %v399 = vor.u32 %v397, %v398
    %v400 = vshll.u32 2131351028, %v391
    %v401 = vshrl.u32 2102212464, %v392
    %v402 = vor.u32 %v400, %v401
    %v403 = vshll.u32 2102212464, %v391
    %v404 = vshrl.u32 920167782, %v392
    %v405 = vor.u32 %v403, %v404
    %v406 = vshll.u32 920167782, %v391
    %v407 = vshrl.u32 1326507024, %v392
    %v408 = vor.u32 %v406, %v407
    %vm409 = vcmp.lt.s32.totalorder %v390, 1
    %vm410 = vcmp.lt.s32.totalorder %v390, 2
    %vm411 = vcmp.lt.s32.totalorder %v390, 3
    %vm412 = vcmp.lt.s32.totalorder %v390, 4
    %v413 = vsel %vm409, %v393, %v396
    %v414 = vsel %vm412, %v402, 2102212464
    %v415 = vsel %vm411, %v399, %v414
    %v416 = vsel %vm410, %v413, %v415
    %v417 = vsel %vm409, %v396, %v399
    %v418 = vsel %vm412, %v405, 920167782
    %v419 = vsel %vm411, %v402, %v418
    %v420 = vsel %vm410, %v417, %v419
    %v421 = vsel %vm409, %v399, %v402
    %v422 = vsel %vm412, %v408, 1326507024
    %v423 = vsel %vm411, %v405, %v422
    %v424 = vsel %vm410, %v421, %v423
    %v425 = vshll.u32 %v385, 8
    %v426 = vmul.u32.u64.compose %v425, %v424
    %v427 = vextract.low.u32 %v426
    %v428 = vextract.high.u32 %v426
    %v429 = vmul.u32.u64.compose %v425, %v420
    %v430 = vextract.low.u32 %v429
    %v431 = vextract.high.u32 %v429
    %v432 = vmul.u32 %v425, %v416
    %v433 = vadd.s32 %v428, %v430
    %vm434 = vc.u32 %v428, %v430
    %v435 = vadd.s32 %v431, 1
    %v436 = vsel %vm434, %v435, %v431
    %v437 = vadd.s32 %v432, %v436
    %v438 = vadd.s32 %v437, 536870912
    %v439 = vshrl.u32 %v438, 30
    %v440 = vshll.u32 %v439, 30
    %v441 = vsub.s32 %v437, %v440
    %vm442 = vcmp.lt.s32.totalorder %v441, 0
    %v443 = vsub.s32 0, %v441
    %v444 = vsel %vm442, %v443, %v441
    %v445 = vclz %v444
    %v446 = vsub.s32 %v445, 2
    %vm447 = vcmp.gt.s32.totalorder 0, %v446
    %v448 = vsel %vm447, 0, %v446
    %v449 = vsub.s32 32, %v448
    %v450 = vshll.u32 %v441, %v448
    %v451 = vshrl.u32 %v433, %v449
    %v452 = vor.u32 %v450, %v451
    %v453 = vsub.s32 4294967266, %v448
    %v454 = vadd.s32 %v453, 127
    %v455 = vshll.u32 %v454, 23
    %v456 = vor.u32 4788187, %v455
    %v457 = vand.u32 2147483647, %v456
    %v459 = vcvt.s32.f32 %v452
    %v460 = vmul.f32 %v459, %v457
    %v461 = vxor.u32 %v460, 2147483648
    %v462 = vsel %vm379, %v461, %v460
    %v463 = vsub.s32 4, %v439
    %v464 = vsel %vm379, %v463, %v439
    %v465 = vsel %vm378, %v65, %v462
    %v466 = vsel %vm378, 0, %v464
    %v467 = vcosq.f32.pop %v465
    %v468 = vsinq.f32.pop %v465
    %vm469 = vweird.f32 %v65
    %v470 = vand.u32 %v466, 3
    %vm471 = vcmp.lt.s32.totalorder %v470, 2
    %vm472 = vcmp.eq.s32.totalorder %v470, 0
    %v473 = vxor.u32 %v468, 2147483648
    %v474 = vsel %vm472, %v467, %v473
    %vm475 = vcmp.eq.s32.totalorder %v470, 2
    %v476 = vxor.u32 %v467, 2147483648
    %v477 = vsel %vm475, %v476, %v468
    %v478 = vsel %vm471, %v474, %v477
    %v479 = vsel %vm469, nan, %v478
    %480 = vset.pattern.permute.xlu0 1
    %481 = vperm.xlu0 %480, %v46
    %v482 = vpop.permute.xlu0 %481
    %484 = vset.pattern.permute.xlu0 1
    %485 = vperm.xlu0 %484, %v47
    %v486 = vpop.permute.xlu0 %485
    %v489 = vlaneseq
    %v490 = vshrl.u32 %v489, 7
    %v491 = vsub.s32 0, %v490
    %v492 = vrot.slane %v30, %v491
    %v494 = vmul.f32 %v482, %v492
    %v495 = vmul.f32 %v486, %v492
    %v496 = vlaneseq
    %v497 = vshrl.u32 %v496, 7
    %v498 = vadd.s32 %v497, 8
    %v499 = vmul.f32 %v169, %v494
    %v500 = vmul.f32 %v273, %v495
    %v501 = vsub.f32 %v499, %v376
    %v502 = vsub.f32 %v500, %v479
    %v503 = vmul.f32 %v501, %v494
    %v504 = vmul.f32 %v502, %v495
    %vm505 = vcmp.ge.s32.totalorder %v497, 4
    %vm506 = vcmp.ge.s32.totalorder %v498, 4
    %v507 = vsel %vm505, 1, 0
    %v508 = vsel %vm506, 1, 0
    %vm509 = vcmp.eq.s32.totalorder %v507, 1
    %vm510 = vcmp.eq.s32.totalorder %v508, 1
    %v511 = vsel %vm509, %v503, %v499
    %v512 = vsel %vm510, %v504, %v500
    %v513 = vmul.f32 %v494, 3.0
    %v514 = vmul.f32 %v495, 3.0
    %v515 = vmul.f32 %v513, %v503
    %v516 = vmul.f32 %v514, %v504
    %v517 = vsub.f32 %v515, %v499
    %v518 = vsub.f32 %v516, %v500
    %vm519 = vcmp.ge.s32.totalorder %v497, 8
    %vm520 = vcmp.ge.s32.totalorder %v498, 8
    %v521 = vsel %vm519, 1, 0
    %v522 = vsel %vm520, 1, 0
    %vm523 = vcmp.eq.s32.totalorder %v521, 1
    %vm524 = vcmp.eq.s32.totalorder %v522, 1
    %v525 = vsel %vm523, %v517, %v511
    %v526 = vsel %vm524, %v518, %v512
    %v528 = vlaneseq
    %v529 = vshrl.u32 %v528, 7
    %v530 = vsub.s32 0, %v529
    %v531 = vrot.slane %v45, %v530
    %533 = vset.pattern.permute.xlu0 2
    %534 = vperm.xlu0 %533, %v46
    %v535 = vpop.permute.xlu0 %534
    %537 = vset.pattern.permute.xlu0 2
    %538 = vperm.xlu0 %537, %v47
    %v539 = vpop.permute.xlu0 %538
    %v541 = vmul.f32 %v531, %v535
    %v542 = vmul.f32 %v531, %v539
    %v543 = vmul.f32 %v541, %v525
    %v544 = vmul.f32 %v542, %v526
    %545 = vst [vmem:[%s2] sm:$0xff] %v543
    %546 = vst [vmem:[%s2 + $0x8] sm:$0xff] %v544
    // Predicated region
    $region14: #{forward_impl.2} parent=1 // pred_check
      _
    $region15: #{forward_impl.2} parent=1 // pred_check_branch
      %548 = sbr.rel (0) target = $region17
    $region16: #{forward_impl.2} parent=1 // pred_region
      _
    $region17: #{forward_impl.2} parent=1 // pred_fallthru
      _
    // Predicated region
    $region18: #{forward_impl.2} parent=1 // pred_check
      _
    $region19: #{forward_impl.2} parent=1 // pred_check_branch
      %550 = sbr.rel (0) target = $region21
    $region20: #{forward_impl.2} parent=1 // pred_region
      _
    $region21: #{forward_impl.2} parent=1 // pred_fallthru
      _
    %551 = vsyncpa [#allocation3], 1

// kernel: forward_impl.3
$region0: #{forward_impl.3}
  #allocation0 [shape = 'u32[]', space=smem, size = 0x4, offset = 0x4, fixed_abs, tag = 'smem constant byte address 0x4 - core index']
  #allocation1 [shape = 'u32[144,128]{1,0:T(1,128)}', space=vmem, size = 0x12000, scoped, tag = 'internal scratch']
  %s0 = inlined_call_operand.vmem [shape: f32[40,12], index: 0, kind: input, shape index: {}]
  %s1 = inlined_call_operand.vmem [shape: f32[40,1], index: 1, kind: input, shape index: {}]
  %s2 = inlined_call_operand.vmem [shape: f32[40,12], index: 2, kind: output, shape index: {}]
  %s3 = sld [smem:[#allocation0]]
  $region18: #{forward_impl.3} parent=0
    _
  %s5 = ssub.s32 1, %s3
  %s6 = scalar_select 0, %s5, %s3
  // Predicated region
  $region2: #{forward_impl.3} parent=0 // pred_check
    _
  $region3: #{forward_impl.3} parent=0 // pred_check_branch
    %8 = sbr.rel (0) target = $region5
  $region4: #{forward_impl.3} parent=0 // pred_region
    _
  $region5: #{forward_impl.3} parent=0 // pred_fallthru
    _
  // Predicated region
  $region6: #{forward_impl.3} parent=0 // pred_check
    _
  $region7: #{forward_impl.3} parent=0 // pred_check_branch
    %10 = sbr.rel (0) target = $region9
  $region8: #{forward_impl.3} parent=0 // pred_region
    _
  $region9: #{forward_impl.3} parent=0 // pred_fallthru
    _
  %v11 = vld [vmem:[%s1] sm:$0xff]
  %v12 = vld [vmem:[%s1 + $0x8] sm:$0xff]
  %v13 = vld [vmem:[%s1 + $0x10] sm:$0xff]
  %v14 = vld [vmem:[%s1 + $0x18] sm:$0xff]
  %v15 = vld [vmem:[%s1 + $0x20] sm:$0xff]
  %v16 = vand.u32 2147483647, %v11
  %vm17 = vcmp.le.f32.partialorder %v16, 0.7853982
  %vm18 = vcmp.lt.s32.totalorder %v11, 0
  %v19 = vand.u32 %v11, 2139095040
  %v20 = vshrl.u32 %v19, 23
  %v21 = vsub.s32 %v20, 127
  %v22 = vand.u32 2147483647, %v11
  %v23 = vand.u32 %v22, 8388607
  %v24 = vor.u32 %v23, 8388608
  %v25 = vsub.s32 0, %v24
  %v26 = vadd.s32 %v21, 1
  %vm27 = vcmp.gt.s32.totalorder %v26, 0
  %v28 = vsel %vm27, %v26, 0
  %v29 = vshrl.u32 %v28, 5
  %v30 = vand.u32 %v28, 31
  %v31 = vsub.s32 32, %v30
  %v32 = vshrl.u32 683565275, %v31
  %v33 = vshll.u32 683565275, %v30
  %v34 = vshrl.u32 2475754826, %v31
  %v35 = vor.u32 %v33, %v34
  %v36 = vshll.u32 2475754826, %v30
  %v37 = vshrl.u32 2131351028, %v31
  %v38 = vor.u32 %v36, %v37
  %v39 = vshll.u32 2131351028, %v30
  %v40 = vshrl.u32 2102212464, %v31
  %v41 = vor.u32 %v39, %v40
  %v42 = vshll.u32 2102212464, %v30
  %v43 = vshrl.u32 920167782, %v31
  %v44 = vor.u32 %v42, %v43
  %v45 = vshll.u32 920167782, %v30
  %v46 = vshrl.u32 1326507024, %v31
  %v47 = vor.u32 %v45, %v46
  %vm48 = vcmp.lt.s32.totalorder %v29, 1
  %vm49 = vcmp.lt.s32.totalorder %v29, 2
  %vm50 = vcmp.lt.s32.totalorder %v29, 3
  %vm51 = vcmp.lt.s32.totalorder %v29, 4
  %v52 = vsel %vm48, %v32, %v35
  %v53 = vsel %vm51, %v41, 2102212464
  %v54 = vsel %vm50, %v38, %v53
  %v55 = vsel %vm49, %v52, %v54
  %v56 = vsel %vm48, %v35, %v38
  %v57 = vsel %vm51, %v44, 920167782
  %v58 = vsel %vm50, %v41, %v57
  %v59 = vsel %vm49, %v56, %v58
  %v60 = vsel %vm48, %v38, %v41
  %v61 = vsel %vm51, %v47, 1326507024
  %v62 = vsel %vm50, %v44, %v61
  %v63 = vsel %vm49, %v60, %v62
  %v64 = vshll.u32 %v24, 8
  %v65 = vmul.u32.u64.compose %v64, %v63
  %v66 = vextract.low.u32 %v65
  %v67 = vextract.high.u32 %v65
  %v68 = vmul.u32.u64.compose %v64, %v59
  %v69 = vextract.low.u32 %v68
  %v70 = vextract.high.u32 %v68
  %v71 = vmul.u32 %v64, %v55
  %v72 = vadd.s32 %v67, %v69
  %vm73 = vc.u32 %v67, %v69
  %v74 = vadd.s32 %v70, 1
  %v75 = vsel %vm73, %v74, %v70
  %v76 = vadd.s32 %v71, %v75
  %v77 = vadd.s32 %v76, 536870912
  %v78 = vshrl.u32 %v77, 30
  %v79 = vshll.u32 %v78, 30
  %v80 = vsub.s32 %v76, %v79
  %vm81 = vcmp.lt.s32.totalorder %v80, 0
  %v82 = vsub.s32 0, %v80
  %v83 = vsel %vm81, %v82, %v80
  %v84 = vclz %v83
  %v85 = vsub.s32 %v84, 2
  %vm86 = vcmp.gt.s32.totalorder 0, %v85
  %v87 = vsel %vm86, 0, %v85
  %v88 = vsub.s32 32, %v87
  %v89 = vshll.u32 %v80, %v87
  %v90 = vshrl.u32 %v72, %v88
  %v91 = vor.u32 %v89, %v90
  %v92 = vsub.s32 4294967266, %v87
  %v93 = vadd.s32 %v92, 127
  %v94 = vshll.u32 %v93, 23
  %v95 = vor.u32 4788187, %v94
  %v96 = vand.u32 2147483647, %v95
  %v98 = vcvt.s32.f32 %v91
  %v99 = vmul.f32 %v98, %v96
  %v100 = vxor.u32 %v99, 2147483648
  %v101 = vsel %vm18, %v100, %v99
  %v102 = vsub.s32 4, %v78
  %v103 = vsel %vm18, %v102, %v78
  %v104 = vsel %vm17, %v11, %v101
  %v105 = vsel %vm17, 0, %v103
  %v106 = vcosq.f32.pop %v104
  %v107 = vsinq.f32.pop %v104
  %vm108 = vweird.f32 %v11
  %v109 = vand.u32 %v105, 3
  %vm110 = vcmp.lt.s32.totalorder %v109, 2
  %vm111 = vcmp.eq.s32.totalorder %v109, 0
  %v112 = vxor.u32 %v107, 2147483648
  %v113 = vsel %vm111, %v106, %v112
  %vm114 = vcmp.eq.s32.totalorder %v109, 2
  %v115 = vxor.u32 %v106, 2147483648
  %v116 = vsel %vm114, %v115, %v107
  %v117 = vsel %vm110, %v113, %v116
  %v118 = vsel %vm108, nan, %v117
  %v119 = vand.u32 2147483647, %v12
  %vm120 = vcmp.le.f32.partialorder %v119, 0.7853982
  %vm121 = vcmp.lt.s32.totalorder %v12, 0
  %v122 = vand.u32 %v12, 2139095040
  %v123 = vshrl.u32 %v122, 23
  %v124 = vsub.s32 %v123, 127
  %v125 = vand.u32 2147483647, %v12
  %v126 = vand.u32 %v125, 8388607
  %v127 = vor.u32 %v126, 8388608
  %v128 = vsub.s32 0, %v127
  %v129 = vadd.s32 %v124, 1
  %vm130 = vcmp.gt.s32.totalorder %v129, 0
  %v131 = vsel %vm130, %v129, 0
  %v132 = vshrl.u32 %v131, 5
  %v133 = vand.u32 %v131, 31
  %v134 = vsub.s32 32, %v133
  %v135 = vshrl.u32 683565275, %v134
  %v136 = vshll.u32 683565275, %v133
  %v137 = vshrl.u32 2475754826, %v134
  %v138 = vor.u32 %v136, %v137
  %v139 = vshll.u32 2475754826, %v133
  %v140 = vshrl.u32 2131351028, %v134
  %v141 = vor.u32 %v139, %v140
  %v142 = vshll.u32 2131351028, %v133
  %v143 = vshrl.u32 2102212464, %v134
  %v144 = vor.u32 %v142, %v143
  %v145 = vshll.u32 2102212464, %v133
  %v146 = vshrl.u32 920167782, %v134
  %v147 = vor.u32 %v145, %v146
  %v148 = vshll.u32 920167782, %v133
  %v149 = vshrl.u32 1326507024, %v134
  %v150 = vor.u32 %v148, %v149
  %vm151 = vcmp.lt.s32.totalorder %v132, 1
  %vm152 = vcmp.lt.s32.totalorder %v132, 2
  %vm153 = vcmp.lt.s32.totalorder %v132, 3
  %vm154 = vcmp.lt.s32.totalorder %v132, 4
  %v155 = vsel %vm151, %v135, %v138
  %v156 = vsel %vm154, %v144, 2102212464
  %v157 = vsel %vm153, %v141, %v156
  %v158 = vsel %vm152, %v155, %v157
  %v159 = vsel %vm151, %v138, %v141
  %v160 = vsel %vm154, %v147, 920167782
  %v161 = vsel %vm153, %v144, %v160
  %v162 = vsel %vm152, %v159, %v161
  %v163 = vsel %vm151, %v141, %v144
  %v164 = vsel %vm154, %v150, 1326507024
  %v165 = vsel %vm153, %v147, %v164
  %v166 = vsel %vm152, %v163, %v165
  %v167 = vshll.u32 %v127, 8
  %v168 = vmul.u32.u64.compose %v167, %v166
  %v169 = vextract.low.u32 %v168
  %v170 = vextract.high.u32 %v168
  %v171 = vmul.u32.u64.compose %v167, %v162
  %v172 = vextract.low.u32 %v171
  %v173 = vextract.high.u32 %v171
  %v174 = vmul.u32 %v167, %v158
  %v175 = vadd.s32 %v170, %v172
  %vm176 = vc.u32 %v170, %v172
  %v177 = vadd.s32 %v173, 1
  %v178 = vsel %vm176, %v177, %v173
  %v179 = vadd.s32 %v174, %v178
  %v180 = vadd.s32 %v179, 536870912
  %v181 = vshrl.u32 %v180, 30
  %v182 = vshll.u32 %v181, 30
  %v183 = vsub.s32 %v179, %v182
  %vm184 = vcmp.lt.s32.totalorder %v183, 0
  %v185 = vsub.s32 0, %v183
  %v186 = vsel %vm184, %v185, %v183
  %v187 = vclz %v186
  %v188 = vsub.s32 %v187, 2
  %vm189 = vcmp.gt.s32.totalorder 0, %v188
  %v190 = vsel %vm189, 0, %v188
  %v191 = vsub.s32 32, %v190
  %v192 = vshll.u32 %v183, %v190
  %v193 = vshrl.u32 %v175, %v191
  %v194 = vor.u32 %v192, %v193
  %v195 = vsub.s32 4294967266, %v190
  %v196 = vadd.s32 %v195, 127
  %v197 = vshll.u32 %v196, 23
  %v198 = vor.u32 4788187, %v197
  %v199 = vand.u32 2147483647, %v198
  %v201 = vcvt.s32.f32 %v194
  %v202 = vmul.f32 %v201, %v199
  %v203 = vxor.u32 %v202, 2147483648
  %v204 = vsel %vm121, %v203, %v202
  %v205 = vsub.s32 4, %v181
  %v206 = vsel %vm121, %v205, %v181
  %v207 = vsel %vm120, %v12, %v204
  %v208 = vsel %vm120, 0, %v206
  %v209 = vcosq.f32.pop %v207
  %v210 = vsinq.f32.pop %v207
  %vm211 = vweird.f32 %v12
  %v212 = vand.u32 %v208, 3
  %vm213 = vcmp.lt.s32.totalorder %v212, 2
  %vm214 = vcmp.eq.s32.totalorder %v212, 0
  %v215 = vxor.u32 %v210, 2147483648
  %v216 = vsel %vm214, %v209, %v215
  %vm217 = vcmp.eq.s32.totalorder %v212, 2
  %v218 = vxor.u32 %v209, 2147483648
  %v219 = vsel %vm217, %v218, %v210
  %v220 = vsel %vm213, %v216, %v219
  %v221 = vsel %vm211, nan, %v220
  %v222 = vand.u32 2147483647, %v13
  %vm223 = vcmp.le.f32.partialorder %v222, 0.7853982
  %vm224 = vcmp.lt.s32.totalorder %v13, 0
  %v225 = vand.u32 %v13, 2139095040
  %v226 = vshrl.u32 %v225, 23
  %v227 = vsub.s32 %v226, 127
  %v228 = vand.u32 2147483647, %v13
  %v229 = vand.u32 %v228, 8388607
  %v230 = vor.u32 %v229, 8388608
  %v231 = vsub.s32 0, %v230
  %v232 = vadd.s32 %v227, 1
  %vm233 = vcmp.gt.s32.totalorder %v232, 0
  %v234 = vsel %vm233, %v232, 0
  %v235 = vshrl.u32 %v234, 5
  %v236 = vand.u32 %v234, 31
  %v237 = vsub.s32 32, %v236
  %v238 = vshrl.u32 683565275, %v237
  %v239 = vshll.u32 683565275, %v236
  %v240 = vshrl.u32 2475754826, %v237
  %v241 = vor.u32 %v239, %v240
  %v242 = vshll.u32 2475754826, %v236
  %v243 = vshrl.u32 2131351028, %v237
  %v244 = vor.u32 %v242, %v243
  %v245 = vshll.u32 2131351028, %v236
  %v246 = vshrl.u32 2102212464, %v237
  %v247 = vor.u32 %v245, %v246
  %v248 = vshll.u32 2102212464, %v236
  %v249 = vshrl.u32 920167782, %v237
  %v250 = vor.u32 %v248, %v249
  %v251 = vshll.u32 920167782, %v236
  %v252 = vshrl.u32 1326507024, %v237
  %v253 = vor.u32 %v251, %v252
  %vm254 = vcmp.lt.s32.totalorder %v235, 1
  %vm255 = vcmp.lt.s32.totalorder %v235, 2
  %vm256 = vcmp.lt.s32.totalorder %v235, 3
  %vm257 = vcmp.lt.s32.totalorder %v235, 4
  %v258 = vsel %vm254, %v238, %v241
  %v259 = vsel %vm257, %v247, 2102212464
  %v260 = vsel %vm256, %v244, %v259
  %v261 = vsel %vm255, %v258, %v260
  %v262 = vsel %vm254, %v241, %v244
  %v263 = vsel %vm257, %v250, 920167782
  %v264 = vsel %vm256, %v247, %v263
  %v265 = vsel %vm255, %v262, %v264
  %v266 = vsel %vm254, %v244, %v247
  %v267 = vsel %vm257, %v253, 1326507024
  %v268 = vsel %vm256, %v250, %v267
  %v269 = vsel %vm255, %v266, %v268
  %v270 = vshll.u32 %v230, 8
  %v271 = vmul.u32.u64.compose %v270, %v269
  %v272 = vextract.low.u32 %v271
  %v273 = vextract.high.u32 %v271
  %v274 = vmul.u32.u64.compose %v270, %v265
  %v275 = vextract.low.u32 %v274
  %v276 = vextract.high.u32 %v274
  %v277 = vmul.u32 %v270, %v261
  %v278 = vadd.s32 %v273, %v275
  %vm279 = vc.u32 %v273, %v275
  %v280 = vadd.s32 %v276, 1
  %v281 = vsel %vm279, %v280, %v276
  %v282 = vadd.s32 %v277, %v281
  %v283 = vadd.s32 %v282, 536870912
  %v284 = vshrl.u32 %v283, 30
  %v285 = vshll.u32 %v284, 30
  %v286 = vsub.s32 %v282, %v285
  %vm287 = vcmp.lt.s32.totalorder %v286, 0
  %v288 = vsub.s32 0, %v286
  %v289 = vsel %vm287, %v288, %v286
  %v290 = vclz %v289
  %v291 = vsub.s32 %v290, 2
  %vm292 = vcmp.gt.s32.totalorder 0, %v291
  %v293 = vsel %vm292, 0, %v291
  %v294 = vsub.s32 32, %v293
  %v295 = vshll.u32 %v286, %v293
  %v296 = vshrl.u32 %v278, %v294
  %v297 = vor.u32 %v295, %v296
  %v298 = vsub.s32 4294967266, %v293
  %v299 = vadd.s32 %v298, 127
  %v300 = vshll.u32 %v299, 23
  %v301 = vor.u32 4788187, %v300
  %v302 = vand.u32 2147483647, %v301
  %v304 = vcvt.s32.f32 %v297
  %v305 = vmul.f32 %v304, %v302
  %v306 = vxor.u32 %v305, 2147483648
  %v307 = vsel %vm224, %v306, %v305
  %v308 = vsub.s32 4, %v284
  %v309 = vsel %vm224, %v308, %v284
  %v310 = vsel %vm223, %v13, %v307
  %v311 = vsel %vm223, 0, %v309
  %v312 = vcosq.f32.pop %v310
  %v313 = vsinq.f32.pop %v310
  %vm314 = vweird.f32 %v13
  %v315 = vand.u32 %v311, 3
  %vm316 = vcmp.lt.s32.totalorder %v315, 2
  %vm317 = vcmp.eq.s32.totalorder %v315, 0
  %v318 = vxor.u32 %v313, 2147483648
  %v319 = vsel %vm317, %v312, %v318
  %vm320 = vcmp.eq.s32.totalorder %v315, 2
  %v321 = vxor.u32 %v312, 2147483648
  %v322 = vsel %vm320, %v321, %v313
  %v323 = vsel %vm316, %v319, %v322
  %v324 = vsel %vm314, nan, %v323
  %v325 = vand.u32 2147483647, %v14
  %vm326 = vcmp.le.f32.partialorder %v325, 0.7853982
  %vm327 = vcmp.lt.s32.totalorder %v14, 0
  %v328 = vand.u32 %v14, 2139095040
  %v329 = vshrl.u32 %v328, 23
  %v330 = vsub.s32 %v329, 127
  %v331 = vand.u32 2147483647, %v14
  %v332 = vand.u32 %v331, 8388607
  %v333 = vor.u32 %v332, 8388608
  %v334 = vsub.s32 0, %v333
  %v335 = vadd.s32 %v330, 1
  %vm336 = vcmp.gt.s32.totalorder %v335, 0
  %v337 = vsel %vm336, %v335, 0
  %v338 = vshrl.u32 %v337, 5
  %v339 = vand.u32 %v337, 31
  %v340 = vsub.s32 32, %v339
  %v341 = vshrl.u32 683565275, %v340
  %v342 = vshll.u32 683565275, %v339
  %v343 = vshrl.u32 2475754826, %v340
  %v344 = vor.u32 %v342, %v343
  %v345 = vshll.u32 2475754826, %v339
  %v346 = vshrl.u32 2131351028, %v340
  %v347 = vor.u32 %v345, %v346
  %v348 = vshll.u32 2131351028, %v339
  %v349 = vshrl.u32 2102212464, %v340
  %v350 = vor.u32 %v348, %v349
  %v351 = vshll.u32 2102212464, %v339
  %v352 = vshrl.u32 920167782, %v340
  %v353 = vor.u32 %v351, %v352
  %v354 = vshll.u32 920167782, %v339
  %v355 = vshrl.u32 1326507024, %v340
  %v356 = vor.u32 %v354, %v355
  %vm357 = vcmp.lt.s32.totalorder %v338, 1
  %vm358 = vcmp.lt.s32.totalorder %v338, 2
  %vm359 = vcmp.lt.s32.totalorder %v338, 3
  %vm360 = vcmp.lt.s32.totalorder %v338, 4
  %v361 = vsel %vm357, %v341, %v344
  %v362 = vsel %vm360, %v350, 2102212464
  %v363 = vsel %vm359, %v347, %v362
  %v364 = vsel %vm358, %v361, %v363
  %v365 = vsel %vm357, %v344, %v347
  %v366 = vsel %vm360, %v353, 920167782
  %v367 = vsel %vm359, %v350, %v366
  %v368 = vsel %vm358, %v365, %v367
  %v369 = vsel %vm357, %v347, %v350
  %v370 = vsel %vm360, %v356, 1326507024
  %v371 = vsel %vm359, %v353, %v370
  %v372 = vsel %vm358, %v369, %v371
  %v373 = vshll.u32 %v333, 8
  %v374 = vmul.u32.u64.compose %v373, %v372
  %v375 = vextract.low.u32 %v374
  %v376 = vextract.high.u32 %v374
  %v377 = vmul.u32.u64.compose %v373, %v368
  %v378 = vextract.low.u32 %v377
  %v379 = vextract.high.u32 %v377
  %v380 = vmul.u32 %v373, %v364
  %v381 = vadd.s32 %v376, %v378
  %vm382 = vc.u32 %v376, %v378
  %v383 = vadd.s32 %v379, 1
  %v384 = vsel %vm382, %v383, %v379
  %v385 = vadd.s32 %v380, %v384
  %v386 = vadd.s32 %v385, 536870912
  %v387 = vshrl.u32 %v386, 30
  %v388 = vshll.u32 %v387, 30
  %v389 = vsub.s32 %v385, %v388
  %vm390 = vcmp.lt.s32.totalorder %v389, 0
  %v391 = vsub.s32 0, %v389
  %v392 = vsel %vm390, %v391, %v389
  %v393 = vclz %v392
  %v394 = vsub.s32 %v393, 2
  %vm395 = vcmp.gt.s32.totalorder 0, %v394
  %v396 = vsel %vm395, 0, %v394
  %v397 = vsub.s32 32, %v396
  %v398 = vshll.u32 %v389, %v396
  %v399 = vshrl.u32 %v381, %v397
  %v400 = vor.u32 %v398, %v399
  %v401 = vsub.s32 4294967266, %v396
  %v402 = vadd.s32 %v401, 127
  %v403 = vshll.u32 %v402, 23
  %v404 = vor.u32 4788187, %v403
  %v405 = vand.u32 2147483647, %v404
  %v407 = vcvt.s32.f32 %v400
  %v408 = vmul.f32 %v407, %v405
  %v409 = vxor.u32 %v408, 2147483648
  %v410 = vsel %vm327, %v409, %v408
  %v411 = vsub.s32 4, %v387
  %v412 = vsel %vm327, %v411, %v387
  %v413 = vsel %vm326, %v14, %v410
  %v414 = vsel %vm326, 0, %v412
  %v415 = vcosq.f32.pop %v413
  %v416 = vsinq.f32.pop %v413
  %vm417 = vweird.f32 %v14
  %v418 = vand.u32 %v414, 3
  %vm419 = vcmp.lt.s32.totalorder %v418, 2
  %vm420 = vcmp.eq.s32.totalorder %v418, 0
  %v421 = vxor.u32 %v416, 2147483648
  %v422 = vsel %vm420, %v415, %v421
  %vm423 = vcmp.eq.s32.totalorder %v418, 2
  %v424 = vxor.u32 %v415, 2147483648
  %v425 = vsel %vm423, %v424, %v416
  %v426 = vsel %vm419, %v422, %v425
  %v427 = vsel %vm417, nan, %v426
  %v428 = vand.u32 2147483647, %v15
  %vm429 = vcmp.le.f32.partialorder %v428, 0.7853982
  %vm430 = vcmp.lt.s32.totalorder %v15, 0
  %v431 = vand.u32 %v15, 2139095040
  %v432 = vshrl.u32 %v431, 23
  %v433 = vsub.s32 %v432, 127
  %v434 = vand.u32 2147483647, %v15
  %v435 = vand.u32 %v434, 8388607
  %v436 = vor.u32 %v435, 8388608
  %v437 = vsub.s32 0, %v436
  %v438 = vadd.s32 %v433, 1
  %vm439 = vcmp.gt.s32.totalorder %v438, 0
  %v440 = vsel %vm439, %v438, 0
  %v441 = vshrl.u32 %v440, 5
  %v442 = vand.u32 %v440, 31
  %v443 = vsub.s32 32, %v442
  %v444 = vshrl.u32 683565275, %v443
  %v445 = vshll.u32 683565275, %v442
  %v446 = vshrl.u32 2475754826, %v443
  %v447 = vor.u32 %v445, %v446
  %v448 = vshll.u32 2475754826, %v442
  %v449 = vshrl.u32 2131351028, %v443
  %v450 = vor.u32 %v448, %v449
  %v451 = vshll.u32 2131351028, %v442
  %v452 = vshrl.u32 2102212464, %v443
  %v453 = vor.u32 %v451, %v452
  %v454 = vshll.u32 2102212464, %v442
  %v455 = vshrl.u32 920167782, %v443
  %v456 = vor.u32 %v454, %v455
  %v457 = vshll.u32 920167782, %v442
  %v458 = vshrl.u32 1326507024, %v443
  %v459 = vor.u32 %v457, %v458
  %vm460 = vcmp.lt.s32.totalorder %v441, 1
  %vm461 = vcmp.lt.s32.totalorder %v441, 2
  %vm462 = vcmp.lt.s32.totalorder %v441, 3
  %vm463 = vcmp.lt.s32.totalorder %v441, 4
  %v464 = vsel %vm460, %v444, %v447
  %v465 = vsel %vm463, %v453, 2102212464
  %v466 = vsel %vm462, %v450, %v465
  %v467 = vsel %vm461, %v464, %v466
  %v468 = vsel %vm460, %v447, %v450
  %v469 = vsel %vm463, %v456, 920167782
  %v470 = vsel %vm462, %v453, %v469
  %v471 = vsel %vm461, %v468, %v470
  %v472 = vsel %vm460, %v450, %v453
  %v473 = vsel %vm463, %v459, 1326507024
  %v474 = vsel %vm462, %v456, %v473
  %v475 = vsel %vm461, %v472, %v474
  %v476 = vshll.u32 %v436, 8
  %v477 = vmul.u32.u64.compose %v476, %v475
  %v478 = vextract.low.u32 %v477
  %v479 = vextract.high.u32 %v477
  %v480 = vmul.u32.u64.compose %v476, %v471
  %v481 = vextract.low.u32 %v480
  %v482 = vextract.high.u32 %v480
  %v483 = vmul.u32 %v476, %v467
  %v484 = vadd.s32 %v479, %v481
  %vm485 = vc.u32 %v479, %v481
  %v486 = vadd.s32 %v482, 1
  %v487 = vsel %vm485, %v486, %v482
  %v488 = vadd.s32 %v483, %v487
  %v489 = vadd.s32 %v488, 536870912
  %v490 = vshrl.u32 %v489, 30
  %v491 = vshll.u32 %v490, 30
  %v492 = vsub.s32 %v488, %v491
  %vm493 = vcmp.lt.s32.totalorder %v492, 0
  %v494 = vsub.s32 0, %v492
  %v495 = vsel %vm493, %v494, %v492
  %v496 = vclz %v495
  %v497 = vsub.s32 %v496, 2
  %vm498 = vcmp.gt.s32.totalorder 0, %v497
  %v499 = vsel %vm498, 0, %v497
  %v500 = vsub.s32 32, %v499
  %v501 = vshll.u32 %v492, %v499
  %v502 = vshrl.u32 %v484, %v500
  %v503 = vor.u32 %v501, %v502
  %v504 = vsub.s32 4294967266, %v499
  %v505 = vadd.s32 %v504, 127
  %v506 = vshll.u32 %v505, 23
  %v507 = vor.u32 4788187, %v506
  %v508 = vand.u32 2147483647, %v507
  %v510 = vcvt.s32.f32 %v503
  %v511 = vmul.f32 %v510, %v508
  %v512 = vxor.u32 %v511, 2147483648
  %v513 = vsel %vm430, %v512, %v511
  %v514 = vsub.s32 4, %v490
  %v515 = vsel %vm430, %v514, %v490
  %v516 = vsel %vm429, %v15, %v513
  %v517 = vsel %vm429, 0, %v515
  %v518 = vcosq.f32.pop %v516
  %v519 = vsinq.f32.pop %v516
  %vm520 = vweird.f32 %v15
  %v521 = vand.u32 %v517, 3
  %vm522 = vcmp.lt.s32.totalorder %v521, 2
  %vm523 = vcmp.eq.s32.totalorder %v521, 0
  %v524 = vxor.u32 %v519, 2147483648
  %v525 = vsel %vm523, %v518, %v524
  %vm526 = vcmp.eq.s32.totalorder %v521, 2
  %v527 = vxor.u32 %v518, 2147483648
  %v528 = vsel %vm526, %v527, %v519
  %v529 = vsel %vm522, %v525, %v528
  %v530 = vsel %vm520, nan, %v529
  %v531 = vmul.f32 %v118, 0.48860252
  %v532 = vmul.f32 %v221, 0.48860252
  %v533 = vmul.f32 %v324, 0.48860252
  %v534 = vmul.f32 %v427, 0.48860252
  %v535 = vmul.f32 %v530, 0.48860252
  %v536 = vmul.f32 %v118, 3.0
  %v537 = vmul.f32 %v221, 3.0
  %v538 = vmul.f32 %v324, 3.0
  %v539 = vmul.f32 %v427, 3.0
  %v540 = vmul.f32 %v530, 3.0
  %v541 = vmul.f32 %v536, %v118
  %v542 = vmul.f32 %v537, %v221
  %v543 = vmul.f32 %v538, %v324
  %v544 = vmul.f32 %v539, %v427
  %v545 = vmul.f32 %v540, %v530
  %v546 = vsub.f32 %v541, 1.0
  %v547 = vsub.f32 %v542, 1.0
  %v548 = vsub.f32 %v543, 1.0
  %v549 = vsub.f32 %v544, 1.0
  %v550 = vsub.f32 %v545, 1.0
  %v551 = vmul.f32 %v546, 0.5
  %v552 = vmul.f32 %v547, 0.5
  %v553 = vmul.f32 %v548, 0.5
  %v554 = vmul.f32 %v549, 0.5
  %v555 = vmul.f32 %v550, 0.5
  %v556 = vmul.f32 %v551, 0.63078314
  %v557 = vmul.f32 %v552, 0.63078314
  %v558 = vmul.f32 %v553, 0.63078314
  %v559 = vmul.f32 %v554, 0.63078314
  %v560 = vmul.f32 %v555, 0.63078314
  %v561 = vlaneseq
  %v562 = vand.u32 %v561, 127
  %vm563 = vcmp.ge.s32.totalorder %v562, 4
  %v564 = vsel %vm563, 1, 0
  %vm565 = vcmp.eq.s32.totalorder %v564, 1
  %567 = vset.pattern.permute.xlu0 0
  %568 = vperm.xlu0 %567, %v531
  %v569 = vpop.permute.xlu0 %568
  %572 = vset.pattern.permute.xlu0 0
  %573 = vperm.xlu0 %572, %v532
  %v574 = vpop.permute.xlu0 %573
  %577 = vset.pattern.permute.xlu0 0
  %578 = vperm.xlu0 %577, %v533
  %v579 = vpop.permute.xlu0 %578
  %582 = vset.pattern.permute.xlu0 0
  %583 = vperm.xlu0 %582, %v534
  %v584 = vpop.permute.xlu0 %583
  %587 = vset.pattern.permute.xlu0 0
  %588 = vperm.xlu0 %587, %v535
  %v589 = vpop.permute.xlu0 %588
  %v591 = vsel %vm565, %v569, 0.2820948
  %v592 = vsel %vm565, %v574, 0.2820948
  %v593 = vsel %vm565, %v579, 0.2820948
  %v594 = vsel %vm565, %v584, 0.2820948
  %v595 = vsel %vm565, %v589, 0.2820948
  %vm596 = vcmp.ge.s32.totalorder %v562, 8
  %v597 = vsel %vm596, 1, 0
  %vm598 = vcmp.eq.s32.totalorder %v597, 1
  %600 = vset.pattern.permute.xlu0 0
  %601 = vperm.xlu0 %600, %v556
  %v602 = vpop.permute.xlu0 %601
  %605 = vset.pattern.permute.xlu0 0
  %606 = vperm.xlu0 %605, %v557
  %v607 = vpop.permute.xlu0 %606
  %610 = vset.pattern.permute.xlu0 0
  %611 = vperm.xlu0 %610, %v558
  %v612 = vpop.permute.xlu0 %611
  %615 = vset.pattern.permute.xlu0 0
  %616 = vperm.xlu0 %615, %v559
  %v617 = vpop.permute.xlu0 %616
  %620 = vset.pattern.permute.xlu0 0
  %621 = vperm.xlu0 %620, %v560
  %v622 = vpop.permute.xlu0 %621
  %v624 = vsel %vm598, %v602, %v591
  %v625 = vsel %vm598, %v607, %v592
  %v626 = vsel %vm598, %v612, %v593
  %v627 = vsel %vm598, %v617, %v594
  %v628 = vsel %vm598, %v622, %v595
  %v629 = vld [vmem:[%s0] sm:$0xff]
  %v630 = vld [vmem:[%s0 + $0x8] sm:$0xff]
  %v631 = vld [vmem:[%s0 + $0x10] sm:$0xff]
  %v632 = vld [vmem:[%s0 + $0x18] sm:$0xff]
  %v633 = vld [vmem:[%s0 + $0x20] sm:$0xff]
  %v634 = vmul.f32 %v629, %v624
  %v635 = vmul.f32 %v630, %v625
  %v636 = vmul.f32 %v631, %v626
  %v637 = vmul.f32 %v632, %v627
  %v638 = vmul.f32 %v633, %v628
  %vm639 = vcmask 97280
  %640 = vst.msk [vmem:[%s2] sm:$0xff] %vm639, %v634
  %641 = vst.msk [vmem:[%s2 + $0x8] sm:$0xff] %vm639, %v635
  %642 = vst.msk [vmem:[%s2 + $0x10] sm:$0xff] %vm639, %v636
  %643 = vst.msk [vmem:[%s2 + $0x18] sm:$0xff] %vm639, %v637
  %644 = vst.msk [vmem:[%s2 + $0x20] sm:$0xff] %vm639, %v638
  // Predicated region
  $region10: #{forward_impl.3} parent=0 // pred_check
    _
  $region11: #{forward_impl.3} parent=0 // pred_check_branch
    %646 = sbr.rel (0) target = $region13
  $region12: #{forward_impl.3} parent=0 // pred_region
    _
  $region13: #{forward_impl.3} parent=0 // pred_fallthru
    _
  // Predicated region
  $region14: #{forward_impl.3} parent=0 // pred_check
    _
  $region15: #{forward_impl.3} parent=0 // pred_check_branch
    %648 = sbr.rel (0) target = $region17
  $region16: #{forward_impl.3} parent=0 // pred_region
    _
  $region17: #{forward_impl.3} parent=0 // pred_fallthru
    _

</llo_original>
